<compile_context>
chip_gen: v7x
topology: tpu7x:2x2x1
jax: 0.10.0
libtpu: 0.0.40
codegen_flags: <defaults>
</compile_context>

<pallas_src>
import numpy as np
import jax
import jax.numpy as jnp
from jax.experimental import pallas as pl
from jax.experimental.pallas import tpu as pltpu

FEATURE_DIM = 32
NUM_HEADS = 4
HEAD_DIM = FEATURE_DIM // NUM_HEADS
BATCH = 2


def custom_attention_kernel(r_ref, s_ref, wcomb_ref, out_ref):
    # wcomb already folds: softmax(N==1) == 1, the alpha blend of V_r/V_s,
    # fc_out, and the "+ r" residual (identity added to the weight), so the
    # whole forward pass is:  out = r @ W_comb + s.
    out_ref[...] = (
        jnp.dot(r_ref[...], wcomb_ref[...],
                preferred_element_type=jnp.float32,
                precision=jax.lax.Precision.HIGHEST)
        + s_ref[...]
    )


def prepare_weights(weights, alpha=1.0, seed=0):
    """Per-(weights, alpha) preparation. Call ONCE and cache the result.

    weights: tuple (Wq_r, Wk_r, Wv_r, Wq_s, Wk_s, Wv_s, Wfc), each
             (out_features, in_features) = (F, F), PyTorch nn.Linear layout.
    Returns (w_comb, alpha_val) where w_comb is the (F, F) folded weight
    (stored (in, out), residual identity absorbed).
    """
    # alpha handling (glue): mirrors np.random.beta(alpha, alpha) of the
    # reference, seeded deterministically so the run is reproducible.
    if alpha > 0:
        rng = np.random.RandomState(seed)
        alpha_val = float(rng.beta(alpha, alpha))
    else:
        alpha_val = 1.0

    _, _, Wvr, _, _, Wvs, Wfc = (np.asarray(w, dtype=np.float64) for w in weights)
    w_mix = alpha_val * Wvr + (1.0 - alpha_val) * Wvs      # alpha blend (linear)
    # Fold the two projections and the "+ r" residual into one weight:
    #   out = (r @ w_mix.T) @ Wfc.T + r + s  ==  r @ (w_mix.T @ Wfc.T + I) + s
    w_comb = w_mix.T @ Wfc.T + np.eye(FEATURE_DIM)
    return jnp.asarray(w_comb, dtype=jnp.float32), alpha_val


def custom_attention(r, s, w_comb):
    """r, s: (B, F) float32.  w_comb: precomputed folded weight from
    prepare_weights (cache it across calls)."""
    B, F = r.shape
    vmem = lambda: pl.BlockSpec(memory_space=pltpu.MemorySpace.VMEM)
    return pl.pallas_call(
        custom_attention_kernel,
        out_shape=jax.ShapeDtypeStruct((B, F), jnp.float32),
        in_specs=[vmem(), vmem(), vmem()],
        out_specs=vmem(),
    )(r, s, w_comb)


def reference_numpy(r, s, weights, alpha_val):
    """Float64 numpy reference mirroring the full PyTorch math (including the
    degenerate N==1 softmax path) for a correctness check."""
    r = np.asarray(r, dtype=np.float64)
    s = np.asarray(s, dtype=np.float64)
    Wqr, Wkr, Wvr, Wqs, Wks, Wvs, Wfc = (np.asarray(w, dtype=np.float64)
                                         for w in weights)
    B, F = r.shape
    H, D = NUM_HEADS, HEAD_DIM

    def proj(x, W):
        return (x @ W.T).reshape(B, 1, H, D).transpose(0, 2, 1, 3)

    def softmax(x):
        m = x.max(axis=-1, keepdims=True)
        e = np.exp(x - m)
        return e / e.sum(axis=-1, keepdims=True)

    Qr, Kr, Vr = proj(r, Wqr), proj(r, Wkr), proj(r, Wvr)
    Qs, Ks, Vs = proj(r, Wqs), proj(r, Wks), proj(r, Wvs)   # all from r (as in ref)
    e_r2s = (Qr @ np.swapaxes(Ks, -1, -2)) / np.sqrt(F)
    e_s2r = (Qs @ np.swapaxes(Kr, -1, -2)) / np.sqrt(F)
    a_r2s, a_s2r = softmax(e_r2s), softmax(e_s2r)
    out = (alpha_val * (a_r2s @ Vr)
           + (1 - alpha_val) * (a_s2r @ Vs)).transpose(0, 2, 1, 3)
    out = out.reshape(B, 1, F) @ Wfc.T
    return out[:, 0, :] + s + r


if __name__ == "__main__":
    key = jax.random.PRNGKey(0)
    keys = jax.random.split(key, 9)
    r = jax.random.normal(keys[0], (BATCH, FEATURE_DIM), jnp.float32)
    s = jax.random.normal(keys[1], (BATCH, FEATURE_DIM), jnp.float32)
    weights = tuple(
        jax.random.normal(k, (FEATURE_DIM, FEATURE_DIM), jnp.float32) * 0.05
        for k in keys[2:9]
    )

    # Weight prep runs once (cacheable per (weights, alpha) pair).
    w_comb, alpha_val = prepare_weights(weights, alpha=1.0)

    out = custom_attention(r, s, w_comb)
    out = jax.block_until_ready(out)

    ref = reference_numpy(r, s, weights, alpha_val)
    assert out.shape == (BATCH, FEATURE_DIM)
    np.testing.assert_allclose(np.asarray(out, dtype=np.float64), ref,
                               rtol=1e-4, atol=1e-4)
    print("KERNEL_OK")
</pallas_src>

<mosaic_0001>
module attributes {stable_mosaic.version = 11 : i64} {
  func.func @custom_attention_kernel(%arg0: memref<2x32xf32, #tpu.memory_space<vmem>>, %arg1: memref<2x32xf32, #tpu.memory_space<vmem>>, %arg2: memref<32x32xf32, #tpu.memory_space<vmem>>, %arg3: memref<2x32xf32, #tpu.memory_space<vmem>>) attributes {dimension_semantics = [], scalar_prefetch = 0 : i64, scratch_operands = 0 : i64, tpu.core_type = #tpu.core_type<tc>} {
    %c0 = arith.constant 0 : index
    %c0_0 = arith.constant 0 : index
    %0 = vector.load %arg0[%c0, %c0_0] : memref<2x32xf32, #tpu.memory_space<vmem>>, vector<2x32xf32>
    %c0_1 = arith.constant 0 : index
    %c0_2 = arith.constant 0 : index
    %1 = vector.load %arg2[%c0_1, %c0_2] : memref<32x32xf32, #tpu.memory_space<vmem>>, vector<32x32xf32>
    %cst = arith.constant dense<0.000000e+00> : vector<2x32xf32>
    %2 = tpu.matmul %0, %1, %cst {dimension_numbers = #tpu.dot_dimension_numbers<[1], [0], [0], [1], [0, 0, 1, 1], [], []>, precision = #tpu.contract_precision<fp32>} : vector<2x32xf32>, vector<32x32xf32>, vector<2x32xf32> -> vector<2x32xf32>
    %c0_3 = arith.constant 0 : index
    %c0_4 = arith.constant 0 : index
    %3 = vector.load %arg1[%c0_3, %c0_4] : memref<2x32xf32, #tpu.memory_space<vmem>>, vector<2x32xf32>
    %4 = arith.addf %2, %3 : vector<2x32xf32>
    %c0_5 = arith.constant 0 : index
    %c0_6 = arith.constant 0 : index
    %5 = vector.load %arg3[%c0_5, %c0_6] : memref<2x32xf32, #tpu.memory_space<vmem>>, vector<2x32xf32>
    tpu.vector_store %arg3[%c0_5, %c0_6], %4 {strides = array<i32>} : memref<2x32xf32, #tpu.memory_space<vmem>>, vector<2x32xf32>,
    return
  }
}

</mosaic_0001>

<llo_original>
// kernel: tpu_custom_call.1
$region0: #{tpu_custom_call.1}
  #allocation0 [shape = 'u32[]', space=smem, size = 0x4, offset = 0x4, fixed_abs, tag = 'smem constant byte address 0x4 - core index']
  #allocation1 [shape = 'u32[144,128]{1,0:T(1,128)}', space=vmem, size = 0x12000, scoped, tag = 'internal scratch']
  %s0 = inlined_call_operand.hbm [shape: f32[2,32], index: 0, kind: input, shape index: {}]
  %s1 = inlined_call_operand.vmem [shape: f32[2,32], index: 1, kind: input, shape index: {}]
  %s2 = inlined_call_operand.hbm [shape: f32[32,32], index: 2, kind: input, shape index: {}]
  %s3 = inlined_call_operand.hbm [shape: f32[2,32], index: 3, kind: output, shape index: {}]
  %s4 = sld [smem:[#allocation0]]
  $region30: #{tpu_custom_call.1} parent=0
    _
  %s6 = ssub.s32 1, %s4
  %s7 = scalar_select 0, %s6, %s4
  $region1: #{tpu_custom_call.1} parent=0
    #allocation2 [shape = 'u8[1024]{0}', space=vmem, size = 0x400, scoped, tag = 'input window, operand 0, single buffered']
    #allocation3 [shape = 's32[1]{0}', space=sflag, size = 0x4, scoped, tag = 'scoped memory for tpu_custom_call.1']
    #allocation4 [shape = 's32[1]{0}', space=sflag, size = 0x4, scoped, tag = 'scoped memory for tpu_custom_call.1']
    #allocation5 [shape = 'u8[16384]{0}', space=vmem, size = 0x4000, scoped, tag = 'input window, operand 2, single buffered']
    #allocation6 [shape = 's32[1]{0}', space=sflag, size = 0x4, scoped, tag = 'scoped memory for tpu_custom_call.1']
    #allocation7 [shape = 'u8[1024]{0}', space=vmem, size = 0x400, scoped, tag = 'output window, operand 0, single buffered']
    %8 = vsyncpa [#allocation3], 0
    %9 = vsyncpa [#allocation6], 0
    %10 = vsyncpa [#allocation4], 0
    // Predicated region
    $region2: #{tpu_custom_call.1} parent=1 // pred_check
      _
    $region3: #{tpu_custom_call.1} parent=1 // pred_check_branch
      %12 = sbr.rel (0) target = $region5
    $region4: #{tpu_custom_call.1} parent=1 // pred_region
      %s14 = ssub.s32 32, 32
      %15 = vsyncadd [#allocation3], %s14
      %s17 = sshll.u32 [#allocation2], 4
      %s18 = int_to_ptr.vmem [resolvable:$true] %s17
      %20 = dma.hbm_to_vmem [thread:$0]  %s0, 32, %s18, [#allocation3]
    $region5: #{tpu_custom_call.1} parent=1 // pred_fallthru
      _
    // Predicated region
    $region6: #{tpu_custom_call.1} parent=1 // pred_check
      _
    $region7: #{tpu_custom_call.1} parent=1 // pred_check_branch
      %22 = sbr.rel (0) target = $region9
    $region8: #{tpu_custom_call.1} parent=1 // pred_region
      _
    $region9: #{tpu_custom_call.1} parent=1 // pred_fallthru
      _
    // Predicated region
    $region10: #{tpu_custom_call.1} parent=1 // pred_check
      _
    $region11: #{tpu_custom_call.1} parent=1 // pred_check_branch
      %24 = sbr.rel (0) target = $region13
    $region12: #{tpu_custom_call.1} parent=1 // pred_region
      %s26 = ssub.s32 512, 512
      %27 = vsyncadd [#allocation6], %s26
      %s28 = sshll.u32 [#allocation5], 4
      %s29 = int_to_ptr.vmem [resolvable:$true] %s28
      %34 = dma.hbm_to_vmem [thread:$0]  %s2, 512, %s29, [#allocation6], 128, 128, 8
    $region13: #{tpu_custom_call.1} parent=1 // pred_fallthru
      _
    // Predicated region
    $region14: #{tpu_custom_call.1} parent=1 // pred_check
      _
    $region15: #{tpu_custom_call.1} parent=1 // pred_check_branch
      %36 = sbr.rel (0) target = $region17
    $region16: #{tpu_custom_call.1} parent=1 // pred_region
      %37 = dma.done [#allocation3], 32
    $region17: #{tpu_custom_call.1} parent=1 // pred_fallthru
      _
    // Predicated region
    $region18: #{tpu_custom_call.1} parent=1 // pred_check
      _
    $region19: #{tpu_custom_call.1} parent=1 // pred_check_branch
      %39 = sbr.rel (0) target = $region21
    $region20: #{tpu_custom_call.1} parent=1 // pred_region
      %40 = dma.done [#allocation6], 512
    $region21: #{tpu_custom_call.1} parent=1 // pred_fallthru
      _
    %v41 = vld [vmem:[#allocation2] sm:$0x3]
    %v42 = vld [vmem:[#allocation5] sm:$0xff]
    %v43 = vld [vmem:[#allocation5 + $0x8] sm:$0xff]
    %v44 = vld [vmem:[#allocation5 + $0x10] sm:$0xff]
    %v45 = vld [vmem:[#allocation5 + $0x18] sm:$0xff]
    %v46 = vld [vmem:[%s1] sm:$0x3]
    %vm47 = vcmask 261120
    %v49 = vsel %vm47, %v41, 0
    %51 = vmatprep.subr.mxu0 0.0
    %v52 = vand.u32 %v42, 4294901760
    %53 = vmatpush1.msra.mxu0 %v52
    %54 = vmatprep.subr.mxu0 0.0
    %v55 = vand.u32 %v43, 4294901760
    %56 = vmatpush1.msra.mxu0 %v55
    %57 = vmatprep.subr.mxu0 0.0
    %v58 = vand.u32 %v44, 4294901760
    %59 = vmatpush1.msra.mxu0 %v58
    %60 = vmatprep.subr.mxu0 0.0
    %v61 = vand.u32 %v45, 4294901760
    %62 = vmatpush1.msra.mxu0 %v61
    %63 = vmatprep.subr.mxu0 0.0
    %64 = vmatpush1.msra.mxu0 0.0
    %65 = vmatprep.subr.mxu0 0.0
    %66 = vmatpush1.msra.mxu0 0.0
    %67 = vmatprep.subr.mxu0 0.0
    %68 = vmatpush1.msra.mxu0 0.0
    %69 = vmatprep.subr.mxu0 0.0
    %70 = vmatpush1.msra.mxu0 0.0
    %71 = vmatprep.subr.mxu0 0.0
    %72 = vmatpush1.msra.mxu0 0.0
    %73 = vmatprep.subr.mxu0 0.0
    %74 = vmatpush1.msra.mxu0 0.0
    %75 = vmatprep.subr.mxu0 0.0
    %76 = vmatpush1.msra.mxu0 0.0
    %77 = vmatprep.subr.mxu0 0.0
    %78 = vmatpush1.msra.mxu0 0.0
    %79 = vmatprep.subr.mxu0 0.0
    %80 = vmatpush1.msra.mxu0 0.0
    %81 = vmatprep.subr.mxu0 0.0
    %82 = vmatpush1.msra.mxu0 0.0
    %83 = vmatprep.subr.mxu0 0.0
    %84 = vmatpush1.msra.mxu0 0.0
    %85 = vmatprep.subr.mxu0 0.0
    %86 = vmatpush1.msra.mxu0 0.0
    %87 = vmatprep.subr.mxu0 0.0
    %88 = vmatpush1.msra.mxu0 0.0
    %89 = vmatprep.subr.mxu0 0.0
    %90 = vmatpush1.msra.mxu0 0.0
    %91 = vmatprep.subr.mxu0 0.0
    %92 = vmatpush1.msra.mxu0 0.0
    %93 = vmatprep.subr.mxu0 0.0
    %94 = vmatpush1.msra.mxu0 0.0
    %95 = vmatprep.subr.mxu0 0.0
    %96 = vmatpush1.msra.mxu0 0.0
    %97 = vmatprep.subr.mxu0 0.0
    %98 = vmatpush1.msra.mxu0 0.0
    %99 = vmatprep.subr.mxu0 0.0
    %100 = vmatpush1.msra.mxu0 0.0
    %101 = vmatprep.subr.mxu0 0.0
    %102 = vmatpush1.msra.mxu0 0.0
    %103 = vmatprep.subr.mxu0 0.0
    %104 = vmatpush1.msra.mxu0 0.0
    %105 = vmatprep.subr.mxu0 0.0
    %106 = vmatpush1.msra.mxu0 0.0
    %107 = vmatprep.subr.mxu0 0.0
    %108 = vmatpush1.msra.mxu0 0.0
    %109 = vmatprep.subr.mxu0 0.0
    %110 = vmatpush1.msra.mxu0 0.0
    %111 = vmatprep.subr.mxu0 0.0
    %112 = vmatpush1.msra.mxu0 0.0
    %113 = vmatprep.subr.mxu0 0.0
    %114 = vmatpush1.msra.mxu0 0.0
    %115 = vmatprep.subr.mxu0 0.0
    %116 = vmatpush1.msra.mxu0 0.0
    %117 = vmatprep.subr.mxu0 0.0
    %118 = vmatpush1.msra.mxu0 0.0
    %119 = vmatprep.mubr.f32.mxu0 0.0
    %v120 = vand.u32 %v49, 4294901760
    %v121 = vsub.f32 %v49, %v120
    %v122 = vand.u32 %v121, 4294901760
    %v123 = vsub.f32 %v121, %v122
    %v124 = vand.u32 %v123, 4294901760
    %125 = vmatmul.mubr.f32.gmra.mrb[0].mxu0 %v124
    %v126 = vpop.f32.mrb[0].mxu0
    %v127 = vadd.f32 %v46, %v126
    %v128 = vpop.f32.mrb[0].mxu0
    %129 = vdwg.mxu0
    %130 = vmatprep.subr.mxu0 0.0
    %v131 = vand.u32 %v42, 4294901760
    %v132 = vsub.f32 %v42, %v131
    %v133 = vand.u32 %v132, 4294901760
    %v134 = vsub.f32 %v132, %v133
    %v135 = vand.u32 %v134, 4294901760
    %136 = vmatpush1.msra.mxu0 %v135
    %137 = vmatprep.subr.mxu0 0.0
    %v138 = vand.u32 %v43, 4294901760
    %v139 = vsub.f32 %v43, %v138
    %v140 = vand.u32 %v139, 4294901760
    %v141 = vsub.f32 %v139, %v140
    %v142 = vand.u32 %v141, 4294901760
    %143 = vmatpush1.msra.mxu0 %v142
    %144 = vmatprep.subr.mxu0 0.0
    %v145 = vand.u32 %v44, 4294901760
    %v146 = vsub.f32 %v44, %v145
    %v147 = vand.u32 %v146, 4294901760
    %v148 = vsub.f32 %v146, %v147
    %v149 = vand.u32 %v148, 4294901760
    %150 = vmatpush1.msra.mxu0 %v149
    %151 = vmatprep.subr.mxu0 0.0
    %v152 = vand.u32 %v45, 4294901760
    %v153 = vsub.f32 %v45, %v152
    %v154 = vand.u32 %v153, 4294901760
    %v155 = vsub.f32 %v153, %v154
    %v156 = vand.u32 %v155, 4294901760
    %157 = vmatpush1.msra.mxu0 %v156
    %158 = vmatprep.subr.mxu0 0.0
    %159 = vmatpush1.msra.mxu0 0.0
    %160 = vmatprep.subr.mxu0 0.0
    %161 = vmatpush1.msra.mxu0 0.0
    %162 = vmatprep.subr.mxu0 0.0
    %163 = vmatpush1.msra.mxu0 0.0
    %164 = vmatprep.subr.mxu0 0.0
    %165 = vmatpush1.msra.mxu0 0.0
    %166 = vmatprep.subr.mxu0 0.0
    %167 = vmatpush1.msra.mxu0 0.0
    %168 = vmatprep.subr.mxu0 0.0
    %169 = vmatpush1.msra.mxu0 0.0
    %170 = vmatprep.subr.mxu0 0.0
    %171 = vmatpush1.msra.mxu0 0.0
    %172 = vmatprep.subr.mxu0 0.0
    %173 = vmatpush1.msra.mxu0 0.0
    %174 = vmatprep.subr.mxu0 0.0
    %175 = vmatpush1.msra.mxu0 0.0
    %176 = vmatprep.subr.mxu0 0.0
    %177 = vmatpush1.msra.mxu0 0.0
    %178 = vmatprep.subr.mxu0 0.0
    %179 = vmatpush1.msra.mxu0 0.0
    %180 = vmatprep.subr.mxu0 0.0
    %181 = vmatpush1.msra.mxu0 0.0
    %182 = vmatprep.subr.mxu0 0.0
    %183 = vmatpush1.msra.mxu0 0.0
    %184 = vmatprep.subr.mxu0 0.0
    %185 = vmatpush1.msra.mxu0 0.0
    %186 = vmatprep.subr.mxu0 0.0
    %187 = vmatpush1.msra.mxu0 0.0
    %188 = vmatprep.subr.mxu0 0.0
    %189 = vmatpush1.msra.mxu0 0.0
    %190 = vmatprep.subr.mxu0 0.0
    %191 = vmatpush1.msra.mxu0 0.0
    %192 = vmatprep.subr.mxu0 0.0
    %193 = vmatpush1.msra.mxu0 0.0
    %194 = vmatprep.subr.mxu0 0.0
    %195 = vmatpush1.msra.mxu0 0.0
    %196 = vmatprep.subr.mxu0 0.0
    %197 = vmatpush1.msra.mxu0 0.0
    %198 = vmatprep.subr.mxu0 0.0
    %199 = vmatpush1.msra.mxu0 0.0
    %200 = vmatprep.subr.mxu0 0.0
    %201 = vmatpush1.msra.mxu0 0.0
    %202 = vmatprep.subr.mxu0 0.0
    %203 = vmatpush1.msra.mxu0 0.0
    %204 = vmatprep.subr.mxu0 0.0
    %205 = vmatpush1.msra.mxu0 0.0
    %206 = vmatprep.subr.mxu0 0.0
    %207 = vmatpush1.msra.mxu0 0.0
    %208 = vmatprep.subr.mxu0 0.0
    %209 = vmatpush1.msra.mxu0 0.0
    %210 = vmatprep.subr.mxu0 0.0
    %211 = vmatpush1.msra.mxu0 0.0
    %212 = vmatprep.subr.mxu0 0.0
    %213 = vmatpush1.msra.mxu0 0.0
    %214 = vmatprep.mubr.f32.mxu0 0.0
    %v215 = vand.u32 %v49, 4294901760
    %216 = vmatmul.mubr.f32.gmra.mrb[0].mxu0 %v215
    %v217 = vpop.f32.mrb[0].mxu0
    %v218 = vadd.f32 %v127, %v217
    %v219 = vpop.f32.mrb[0].mxu0
    %220 = vdwg.mxu0
    %221 = vmatprep.subr.mxu0 0.0
    %v222 = vand.u32 %v42, 4294901760
    %v223 = vsub.f32 %v42, %v222
    %224 = vmatpush1.msra.mxu0 %v223
    %225 = vmatprep.subr.mxu0 0.0
    %v226 = vand.u32 %v43, 4294901760
    %v227 = vsub.f32 %v43, %v226
    %228 = vmatpush1.msra.mxu0 %v227
    %229 = vmatprep.subr.mxu0 0.0
    %v230 = vand.u32 %v44, 4294901760
    %v231 = vsub.f32 %v44, %v230
    %232 = vmatpush1.msra.mxu0 %v231
    %233 = vmatprep.subr.mxu0 0.0
    %v234 = vand.u32 %v45, 4294901760
    %v235 = vsub.f32 %v45, %v234
    %236 = vmatpush1.msra.mxu0 %v235
    %237 = vmatprep.subr.mxu0 0.0
    %238 = vmatpush1.msra.mxu0 0.0
    %239 = vmatprep.subr.mxu0 0.0
    %240 = vmatpush1.msra.mxu0 0.0
    %241 = vmatprep.subr.mxu0 0.0
    %242 = vmatpush1.msra.mxu0 0.0
    %243 = vmatprep.subr.mxu0 0.0
    %244 = vmatpush1.msra.mxu0 0.0
    %245 = vmatprep.subr.mxu0 0.0
    %246 = vmatpush1.msra.mxu0 0.0
    %247 = vmatprep.subr.mxu0 0.0
    %248 = vmatpush1.msra.mxu0 0.0
    %249 = vmatprep.subr.mxu0 0.0
    %250 = vmatpush1.msra.mxu0 0.0
    %251 = vmatprep.subr.mxu0 0.0
    %252 = vmatpush1.msra.mxu0 0.0
    %253 = vmatprep.subr.mxu0 0.0
    %254 = vmatpush1.msra.mxu0 0.0
    %255 = vmatprep.subr.mxu0 0.0
    %256 = vmatpush1.msra.mxu0 0.0
    %257 = vmatprep.subr.mxu0 0.0
    %258 = vmatpush1.msra.mxu0 0.0
    %259 = vmatprep.subr.mxu0 0.0
    %260 = vmatpush1.msra.mxu0 0.0
    %261 = vmatprep.subr.mxu0 0.0
    %262 = vmatpush1.msra.mxu0 0.0
    %263 = vmatprep.subr.mxu0 0.0
    %264 = vmatpush1.msra.mxu0 0.0
    %265 = vmatprep.subr.mxu0 0.0
    %266 = vmatpush1.msra.mxu0 0.0
    %267 = vmatprep.subr.mxu0 0.0
    %268 = vmatpush1.msra.mxu0 0.0
    %269 = vmatprep.subr.mxu0 0.0
    %270 = vmatpush1.msra.mxu0 0.0
    %271 = vmatprep.subr.mxu0 0.0
    %272 = vmatpush1.msra.mxu0 0.0
    %273 = vmatprep.subr.mxu0 0.0
    %274 = vmatpush1.msra.mxu0 0.0
    %275 = vmatprep.subr.mxu0 0.0
    %276 = vmatpush1.msra.mxu0 0.0
    %277 = vmatprep.subr.mxu0 0.0
    %278 = vmatpush1.msra.mxu0 0.0
    %279 = vmatprep.subr.mxu0 0.0
    %280 = vmatpush1.msra.mxu0 0.0
    %281 = vmatprep.subr.mxu0 0.0
    %282 = vmatpush1.msra.mxu0 0.0
    %283 = vmatprep.subr.mxu0 0.0
    %284 = vmatpush1.msra.mxu0 0.0
    %285 = vmatprep.subr.mxu0 0.0
    %286 = vmatpush1.msra.mxu0 0.0
    %287 = vmatprep.subr.mxu0 0.0
    %288 = vmatpush1.msra.mxu0 0.0
    %289 = vmatprep.subr.mxu0 0.0
    %290 = vmatpush1.msra.mxu0 0.0
    %291 = vmatprep.subr.mxu0 0.0
    %292 = vmatpush1.msra.mxu0 0.0
    %293 = vmatprep.mubr.f32.mxu0 0.0
    %v294 = vand.u32 %v49, 4294901760
    %v295 = vsub.f32 %v49, %v294
    %296 = vmatmul.mubr.f32.gmra.mrb[0].mxu0 %v295
    %v297 = vpop.f32.mrb[0].mxu0
    %v298 = vadd.f32 %v218, %v297
    %v299 = vpop.f32.mrb[0].mxu0
    %300 = vdwg.mxu0
    %301 = vmatprep.subr.mxu0 0.0
    %v302 = vand.u32 %v42, 4294901760
    %303 = vmatpush1.msra.mxu0 %v302
    %304 = vmatprep.subr.mxu0 0.0
    %v305 = vand.u32 %v43, 4294901760
    %306 = vmatpush1.msra.mxu0 %v305
    %307 = vmatprep.subr.mxu0 0.0
    %v308 = vand.u32 %v44, 4294901760
    %309 = vmatpush1.msra.mxu0 %v308
    %310 = vmatprep.subr.mxu0 0.0
    %v311 = vand.u32 %v45, 4294901760
    %312 = vmatpush1.msra.mxu0 %v311
    %313 = vmatprep.subr.mxu0 0.0
    %314 = vmatpush1.msra.mxu0 0.0
    %315 = vmatprep.subr.mxu0 0.0
    %316 = vmatpush1.msra.mxu0 0.0
    %317 = vmatprep.subr.mxu0 0.0
    %318 = vmatpush1.msra.mxu0 0.0
    %319 = vmatprep.subr.mxu0 0.0
    %320 = vmatpush1.msra.mxu0 0.0
    %321 = vmatprep.subr.mxu0 0.0
    %322 = vmatpush1.msra.mxu0 0.0
    %323 = vmatprep.subr.mxu0 0.0
    %324 = vmatpush1.msra.mxu0 0.0
    %325 = vmatprep.subr.mxu0 0.0
    %326 = vmatpush1.msra.mxu0 0.0
    %327 = vmatprep.subr.mxu0 0.0
    %328 = vmatpush1.msra.mxu0 0.0
    %329 = vmatprep.subr.mxu0 0.0
    %330 = vmatpush1.msra.mxu0 0.0
    %331 = vmatprep.subr.mxu0 0.0
    %332 = vmatpush1.msra.mxu0 0.0
    %333 = vmatprep.subr.mxu0 0.0
    %334 = vmatpush1.msra.mxu0 0.0
    %335 = vmatprep.subr.mxu0 0.0
    %336 = vmatpush1.msra.mxu0 0.0
    %337 = vmatprep.subr.mxu0 0.0
    %338 = vmatpush1.msra.mxu0 0.0
    %339 = vmatprep.subr.mxu0 0.0
    %340 = vmatpush1.msra.mxu0 0.0
    %341 = vmatprep.subr.mxu0 0.0
    %342 = vmatpush1.msra.mxu0 0.0
    %343 = vmatprep.subr.mxu0 0.0
    %344 = vmatpush1.msra.mxu0 0.0
    %345 = vmatprep.subr.mxu0 0.0
    %346 = vmatpush1.msra.mxu0 0.0
    %347 = vmatprep.subr.mxu0 0.0
    %348 = vmatpush1.msra.mxu0 0.0
    %349 = vmatprep.subr.mxu0 0.0
    %350 = vmatpush1.msra.mxu0 0.0
    %351 = vmatprep.subr.mxu0 0.0
    %352 = vmatpush1.msra.mxu0 0.0
    %353 = vmatprep.subr.mxu0 0.0
    %354 = vmatpush1.msra.mxu0 0.0
    %355 = vmatprep.subr.mxu0 0.0
    %356 = vmatpush1.msra.mxu0 0.0
    %357 = vmatprep.subr.mxu0 0.0
    %358 = vmatpush1.msra.mxu0 0.0
    %359 = vmatprep.subr.mxu0 0.0
    %360 = vmatpush1.msra.mxu0 0.0
    %361 = vmatprep.subr.mxu0 0.0
    %362 = vmatpush1.msra.mxu0 0.0
    %363 = vmatprep.subr.mxu0 0.0
    %364 = vmatpush1.msra.mxu0 0.0
    %365 = vmatprep.subr.mxu0 0.0
    %366 = vmatpush1.msra.mxu0 0.0
    %367 = vmatprep.subr.mxu0 0.0
    %368 = vmatpush1.msra.mxu0 0.0
    %369 = vmatprep.mubr.f32.mxu0 0.0
    %v370 = vand.u32 %v49, 4294901760
    %v371 = vsub.f32 %v49, %v370
    %v372 = vand.u32 %v371, 4294901760
    %373 = vmatmul.mubr.f32.gmra.mrb[0].mxu0 %v372
    %v374 = vpop.f32.mrb[0].mxu0
    %v375 = vadd.f32 %v298, %v374
    %v376 = vpop.f32.mrb[0].mxu0
    %377 = vdwg.mxu0
    %378 = vmatprep.subr.mxu0 0.0
    %v379 = vand.u32 %v42, 4294901760
    %v380 = vsub.f32 %v42, %v379
    %v381 = vand.u32 %v380, 4294901760
    %382 = vmatpush1.msra.mxu0 %v381
    %383 = vmatprep.subr.mxu0 0.0
    %v384 = vand.u32 %v43, 4294901760
    %v385 = vsub.f32 %v43, %v384
    %v386 = vand.u32 %v385, 4294901760
    %387 = vmatpush1.msra.mxu0 %v386
    %388 = vmatprep.subr.mxu0 0.0
    %v389 = vand.u32 %v44, 4294901760
    %v390 = vsub.f32 %v44, %v389
    %v391 = vand.u32 %v390, 4294901760
    %392 = vmatpush1.msra.mxu0 %v391
    %393 = vmatprep.subr.mxu0 0.0
    %v394 = vand.u32 %v45, 4294901760
    %v395 = vsub.f32 %v45, %v394
    %v396 = vand.u32 %v395, 4294901760
    %397 = vmatpush1.msra.mxu0 %v396
    %398 = vmatprep.subr.mxu0 0.0
    %399 = vmatpush1.msra.mxu0 0.0
    %400 = vmatprep.subr.mxu0 0.0
    %401 = vmatpush1.msra.mxu0 0.0
    %402 = vmatprep.subr.mxu0 0.0
    %403 = vmatpush1.msra.mxu0 0.0
    %404 = vmatprep.subr.mxu0 0.0
    %405 = vmatpush1.msra.mxu0 0.0
    %406 = vmatprep.subr.mxu0 0.0
    %407 = vmatpush1.msra.mxu0 0.0
    %408 = vmatprep.subr.mxu0 0.0
    %409 = vmatpush1.msra.mxu0 0.0
    %410 = vmatprep.subr.mxu0 0.0
    %411 = vmatpush1.msra.mxu0 0.0
    %412 = vmatprep.subr.mxu0 0.0
    %413 = vmatpush1.msra.mxu0 0.0
    %414 = vmatprep.subr.mxu0 0.0
    %415 = vmatpush1.msra.mxu0 0.0
    %416 = vmatprep.subr.mxu0 0.0
    %417 = vmatpush1.msra.mxu0 0.0
    %418 = vmatprep.subr.mxu0 0.0
    %419 = vmatpush1.msra.mxu0 0.0
    %420 = vmatprep.subr.mxu0 0.0
    %421 = vmatpush1.msra.mxu0 0.0
    %422 = vmatprep.subr.mxu0 0.0
    %423 = vmatpush1.msra.mxu0 0.0
    %424 = vmatprep.subr.mxu0 0.0
    %425 = vmatpush1.msra.mxu0 0.0
    %426 = vmatprep.subr.mxu0 0.0
    %427 = vmatpush1.msra.mxu0 0.0
    %428 = vmatprep.subr.mxu0 0.0
    %429 = vmatpush1.msra.mxu0 0.0
    %430 = vmatprep.subr.mxu0 0.0
    %431 = vmatpush1.msra.mxu0 0.0
    %432 = vmatprep.subr.mxu0 0.0
    %433 = vmatpush1.msra.mxu0 0.0
    %434 = vmatprep.subr.mxu0 0.0
    %435 = vmatpush1.msra.mxu0 0.0
    %436 = vmatprep.subr.mxu0 0.0
    %437 = vmatpush1.msra.mxu0 0.0
    %438 = vmatprep.subr.mxu0 0.0
    %439 = vmatpush1.msra.mxu0 0.0
    %440 = vmatprep.subr.mxu0 0.0
    %441 = vmatpush1.msra.mxu0 0.0
    %442 = vmatprep.subr.mxu0 0.0
    %443 = vmatpush1.msra.mxu0 0.0
    %444 = vmatprep.subr.mxu0 0.0
    %445 = vmatpush1.msra.mxu0 0.0
    %446 = vmatprep.subr.mxu0 0.0
    %447 = vmatpush1.msra.mxu0 0.0
    %448 = vmatprep.subr.mxu0 0.0
    %449 = vmatpush1.msra.mxu0 0.0
    %450 = vmatprep.subr.mxu0 0.0
    %451 = vmatpush1.msra.mxu0 0.0
    %452 = vmatprep.subr.mxu0 0.0
    %453 = vmatpush1.msra.mxu0 0.0
    %454 = vmatprep.mubr.f32.mxu0 0.0
    %v455 = vand.u32 %v49, 4294901760
    %456 = vmatmul.mubr.f32.gmra.mrb[0].mxu0 %v455
    %v457 = vpop.f32.mrb[0].mxu0
    %v458 = vadd.f32 %v375, %v457
    %v459 = vpop.f32.mrb[0].mxu0
    %460 = vdwg.mxu0
    %461 = vmatprep.subr.mxu0 0.0
    %v462 = vand.u32 %v42, 4294901760
    %463 = vmatpush1.msra.mxu0 %v462
    %464 = vmatprep.subr.mxu0 0.0
    %v465 = vand.u32 %v43, 4294901760
    %466 = vmatpush1.msra.mxu0 %v465
    %467 = vmatprep.subr.mxu0 0.0
    %v468 = vand.u32 %v44, 4294901760
    %469 = vmatpush1.msra.mxu0 %v468
    %470 = vmatprep.subr.mxu0 0.0
    %v471 = vand.u32 %v45, 4294901760
    %472 = vmatpush1.msra.mxu0 %v471
    %473 = vmatprep.subr.mxu0 0.0
    %474 = vmatpush1.msra.mxu0 0.0
    %475 = vmatprep.subr.mxu0 0.0
    %476 = vmatpush1.msra.mxu0 0.0
    %477 = vmatprep.subr.mxu0 0.0
    %478 = vmatpush1.msra.mxu0 0.0
    %479 = vmatprep.subr.mxu0 0.0
    %480 = vmatpush1.msra.mxu0 0.0
    %481 = vmatprep.subr.mxu0 0.0
    %482 = vmatpush1.msra.mxu0 0.0
    %483 = vmatprep.subr.mxu0 0.0
    %484 = vmatpush1.msra.mxu0 0.0
    %485 = vmatprep.subr.mxu0 0.0
    %486 = vmatpush1.msra.mxu0 0.0
    %487 = vmatprep.subr.mxu0 0.0
    %488 = vmatpush1.msra.mxu0 0.0
    %489 = vmatprep.subr.mxu0 0.0
    %490 = vmatpush1.msra.mxu0 0.0
    %491 = vmatprep.subr.mxu0 0.0
    %492 = vmatpush1.msra.mxu0 0.0
    %493 = vmatprep.subr.mxu0 0.0
    %494 = vmatpush1.msra.mxu0 0.0
    %495 = vmatprep.subr.mxu0 0.0
    %496 = vmatpush1.msra.mxu0 0.0
    %497 = vmatprep.subr.mxu0 0.0
    %498 = vmatpush1.msra.mxu0 0.0
    %499 = vmatprep.subr.mxu0 0.0
    %500 = vmatpush1.msra.mxu0 0.0
    %501 = vmatprep.subr.mxu0 0.0
    %502 = vmatpush1.msra.mxu0 0.0
    %503 = vmatprep.subr.mxu0 0.0
    %504 = vmatpush1.msra.mxu0 0.0
    %505 = vmatprep.subr.mxu0 0.0
    %506 = vmatpush1.msra.mxu0 0.0
    %507 = vmatprep.subr.mxu0 0.0
    %508 = vmatpush1.msra.mxu0 0.0
    %509 = vmatprep.subr.mxu0 0.0
    %510 = vmatpush1.msra.mxu0 0.0
    %511 = vmatprep.subr.mxu0 0.0
    %512 = vmatpush1.msra.mxu0 0.0
    %513 = vmatprep.subr.mxu0 0.0
    %514 = vmatpush1.msra.mxu0 0.0
    %515 = vmatprep.subr.mxu0 0.0
    %516 = vmatpush1.msra.mxu0 0.0
    %517 = vmatprep.subr.mxu0 0.0
    %518 = vmatpush1.msra.mxu0 0.0
    %519 = vmatprep.subr.mxu0 0.0
    %520 = vmatpush1.msra.mxu0 0.0
    %521 = vmatprep.subr.mxu0 0.0
    %522 = vmatpush1.msra.mxu0 0.0
    %523 = vmatprep.subr.mxu0 0.0
    %524 = vmatpush1.msra.mxu0 0.0
    %525 = vmatprep.subr.mxu0 0.0
    %526 = vmatpush1.msra.mxu0 0.0
    %527 = vmatprep.subr.mxu0 0.0
    %528 = vmatpush1.msra.mxu0 0.0
    %529 = vmatprep.mubr.f32.mxu0 0.0
    %v530 = vand.u32 %v49, 4294901760
    %531 = vmatmul.mubr.f32.gmra.mrb[0].mxu0 %v530
    %v532 = vpop.f32.mrb[0].mxu0
    %v533 = vadd.f32 %v458, %v532
    %v534 = vpop.f32.mrb[0].mxu0
    %535 = vdwg.mxu0
    %vm536 = vcmask 254976
    %537 = vst.msk [vmem:[#allocation7] sm:$0x3] %vm536, %v533
    // Predicated region
    $region22: #{tpu_custom_call.1} parent=1 // pred_check
      _
    $region23: #{tpu_custom_call.1} parent=1 // pred_check_branch
      %539 = sbr.rel (0) target = $region25
    $region24: #{tpu_custom_call.1} parent=1 // pred_region
      %s541 = ssub.s32 32, 32
      %542 = vsyncadd [#allocation4], %s541
      %s544 = sshll.u32 [#allocation7], 4
      %s545 = int_to_ptr.vmem [resolvable:$true] %s544
      %547 = dma.vmem_to_hbm [thread:$0]  %s545, 32, %s3, [#allocation4]
    $region25: #{tpu_custom_call.1} parent=1 // pred_fallthru
      _
    // Predicated region
    $region26: #{tpu_custom_call.1} parent=1 // pred_check
      _
    $region27: #{tpu_custom_call.1} parent=1 // pred_check_branch
      %549 = sbr.rel (0) target = $region29
    $region28: #{tpu_custom_call.1} parent=1 // pred_region
      %550 = dma.done [#allocation4], 32
    $region29: #{tpu_custom_call.1} parent=1 // pred_fallthru
      _
    %551 = vsyncpa [#allocation3], 1
    %552 = vsyncpa [#allocation6], 1
    %553 = vsyncpa [#allocation4], 1

</llo_original>
